<compile_context>
chip_gen: v7x
topology: tpu7x:2x2x1
jax: 0.10.0
libtpu: 0.0.40
codegen_flags: <defaults>
</compile_context>

<pallas_src>
import functools
import math

import jax
import jax.numpy as jnp
from jax.experimental import pallas as pl
from jax.experimental.pallas import tpu as pltpu


# ----------------------------------------------------------------------------
# Config
# ----------------------------------------------------------------------------

# MXU operand dtype (accumulation is always f32). Set to None for pure f32.
MATMUL_DTYPE = jnp.bfloat16
LN_EPS = 1e-5                       # torch.nn.LayerNorm default
_VMEM_LIMIT_BYTES = 32 * 1024 * 1024  # conservative: fits v7x's 64 MiB VMEM


def _mxu_cast(x):
    return x.astype(MATMUL_DTYPE) if MATMUL_DTYPE is not None else x


def _mxu_dot(a, b):
    # MXU matmul with f32 accumulation; operands optionally bf16.
    return jnp.dot(_mxu_cast(a), _mxu_cast(b), preferred_element_type=jnp.float32)


def _pick_tile(n, target):
    """Tile <= target along a dim of extent n (multiple of 8 or full extent)."""
    if n <= target:
        return n
    t = max(8, target - target % 8)
    for c in range(t, 7, -8):
        if n % c == 0:
            return c
    return t


def _choose_m_tile(m, act_row_bytes, weight_bytes, max_tile=1024):
    """Largest M-tile whose double-buffered activation slabs + resident
    weights fit half the VMEM budget (headroom for compiler scratch)."""
    avail = max(_VMEM_LIMIT_BYTES // 2 - weight_bytes, 1 << 19)
    cap = int(min(max(avail // (2 * max(act_row_bytes, 1)), 8), max_tile, m))
    if m <= cap:
        return m
    cap = max(8, cap - cap % 8)
    for t in range(cap, 7, -8):
        if m % t == 0:
            return t
    return cap


def _compiler_params(semantics):
    return pltpu.CompilerParams(dimension_semantics=semantics,
                                vmem_limit_bytes=_VMEM_LIMIT_BYTES)


# ----------------------------------------------------------------------------
# Kernels
# ----------------------------------------------------------------------------

def _add_pe_kernel(x_ref, pe_ref, o_ref):
    # x: (ts, D) slab of one batch element; pe: (ts, D)
    o_ref[...] = x_ref[...] + pe_ref[...]


def _qkv_kernel(x_ref, w_ref, b_ref, q_ref, k_ref, v_ref, *, dq, dk):
    # Fused QKV projection: y = x @ [Wq|Wk|Wv] + [bq|bk|bv]; x read once.
    y = _mxu_dot(x_ref[...], w_ref[...]) + b_ref[...]
    q_ref[...] = y[:, :dq].astype(q_ref.dtype)
    k_ref[...] = y[:, dq:dq + dk].astype(k_ref.dtype)
    v_ref[...] = y[:, dq + dk:].astype(v_ref.dtype)


def _attn_body(q, k, v, mask, o_ref, a_ref, *, scale, n_head, d_k, d_v):
    # One batch element, all heads. q,k: (S, H*Dk)  v: (S, H*Dv)
    probs, ctxs = [], []
    for h in range(n_head):                       # static unroll over heads
        qh = _mxu_cast(q[:, h * d_k:(h + 1) * d_k])
        kh = _mxu_cast(k[:, h * d_k:(h + 1) * d_k])
        vh = _mxu_cast(v[:, h * d_v:(h + 1) * d_v])
        # scores contracting d_k directly (no materialized k.T)
        s = jax.lax.dot_general(qh, kh, (((1,), (1,)), ((), ())),
                                preferred_element_type=jnp.float32) * scale
        if mask is not None:
            s = jnp.where(mask != 0, s, -1e9)
        m = jnp.max(s, axis=-1, keepdims=True)
        e = jnp.exp(s - m)
        denom = jnp.sum(e, axis=-1, keepdims=True)
        p = e * pl.reciprocal(denom, approx=True)       # EUP reciprocal
        probs.append(p[None])
        ctxs.append(jnp.dot(_mxu_cast(p), vh, preferred_element_type=jnp.float32))
    # single lane-dense stores
    a_ref[...] = jnp.concatenate(probs, axis=0).astype(a_ref.dtype)   # (H,S,S)
    o_ref[...] = jnp.concatenate(ctxs, axis=1).astype(o_ref.dtype)    # (S,H*Dv)


def _attn_kernel(q_ref, k_ref, v_ref, o_ref, a_ref, **kw):
    _attn_body(q_ref[...], k_ref[...], v_ref[...], None, o_ref, a_ref, **kw)


def _attn_kernel_masked(q_ref, k_ref, v_ref, m_ref, o_ref, a_ref, **kw):
    _attn_body(q_ref[...], k_ref[...], v_ref[...], m_ref[...], o_ref, a_ref, **kw)


def _proj_add_ln_kernel(ctx_ref, res_ref, w_ref, b_ref, g_ref, bb_ref, o_ref, *, eps):
    # LN(ctx @ Wo + bo + residual) * gamma + beta   (post-norm MHA tail)
    y = _mxu_dot(ctx_ref[...], w_ref[...]) + b_ref[...]
    x = y + res_ref[...].astype(jnp.float32)
    mu = jnp.mean(x, axis=-1, keepdims=True)
    var = jnp.mean((x - mu) * (x - mu), axis=-1, keepdims=True)
    o_ref[...] = (((x - mu) * jax.lax.rsqrt(var + eps)) * g_ref[...]
                  + bb_ref[...]).astype(o_ref.dtype)


def _ffn_add_ln_kernel(x_ref, w1_ref, b1_ref, w2_ref, b2_ref, g_ref, bb_ref,
                       o_ref, *, eps):
    # LN(relu(x @ W1 + b1) @ W2 + b2 + x) * gamma + beta   (post-norm FFN)
    x = x_ref[...].astype(jnp.float32)
    h = jnp.maximum(_mxu_dot(x, w1_ref[...]) + b1_ref[...], 0.0)
    y = _mxu_dot(h, w2_ref[...]) + b2_ref[...]
    z = y + x
    mu = jnp.mean(z, axis=-1, keepdims=True)
    var = jnp.mean((z - mu) * (z - mu), axis=-1, keepdims=True)
    o_ref[...] = (((z - mu) * jax.lax.rsqrt(var + eps)) * g_ref[...]
                  + bb_ref[...]).astype(o_ref.dtype)


# ----------------------------------------------------------------------------
# Wrappers
# ----------------------------------------------------------------------------

def pallas_add_pe(x, pe):
    B, S, D = x.shape
    ts = _pick_tile(S, 512)
    return pl.pallas_call(
        _add_pe_kernel,
        out_shape=jax.ShapeDtypeStruct((B, S, D), jnp.float32),
        grid=(B, pl.cdiv(S, ts)),
        in_specs=[pl.BlockSpec((None, ts, D), lambda b, s: (b, s, 0)),
                  pl.BlockSpec((ts, D), lambda b, s: (s, 0))],
        out_specs=pl.BlockSpec((None, ts, D), lambda b, s: (b, s, 0)),
        compiler_params=_compiler_params(("parallel", "parallel")),
    )(x, pe)


def pallas_qkv(x2, w_qkv, b_qkv, dq, dk, dv):
    M, D = x2.shape
    N = dq + dk + dv
    wb = int(w_qkv.size) * w_qkv.dtype.itemsize + int(b_qkv.size) * 4
    tm = _choose_m_tile(M, 4 * (D + N), wb)
    kernel = functools.partial(_qkv_kernel, dq=dq, dk=dk)
    return pl.pallas_call(
        kernel,
        out_shape=(jax.ShapeDtypeStruct((M, dq), jnp.float32),
                   jax.ShapeDtypeStruct((M, dk), jnp.float32),
                   jax.ShapeDtypeStruct((M, dv), jnp.float32)),
        grid=(pl.cdiv(M, tm),),
        in_specs=[pl.BlockSpec((tm, D), lambda i: (i, 0)),
                  pl.BlockSpec((D, N), lambda i: (0, 0)),
                  pl.BlockSpec((1, N), lambda i: (0, 0))],
        out_specs=(pl.BlockSpec((tm, dq), lambda i: (i, 0)),
                   pl.BlockSpec((tm, dk), lambda i: (i, 0)),
                   pl.BlockSpec((tm, dv), lambda i: (i, 0))),
        compiler_params=_compiler_params(("parallel",)),
    )(x2, w_qkv, b_qkv.reshape(1, N))


def pallas_attention(q, k, v, mask_i8, n_head, d_k, d_v):
    B, S, hdk = q.shape
    hdv = v.shape[-1]
    kw = dict(scale=1.0 / math.sqrt(d_k), n_head=n_head, d_k=d_k, d_v=d_v)
    in_specs = [pl.BlockSpec((None, S, hdk), lambda b: (b, 0, 0)),
                pl.BlockSpec((None, S, hdk), lambda b: (b, 0, 0)),
                pl.BlockSpec((None, S, hdv), lambda b: (b, 0, 0))]
    args = [q, k, v]
    if mask_i8 is not None:
        in_specs.append(pl.BlockSpec((None, S, S), lambda b: (b, 0, 0)))
        args.append(mask_i8)
        kernel = functools.partial(_attn_kernel_masked, **kw)
    else:
        kernel = functools.partial(_attn_kernel, **kw)
    ctx, attn = pl.pallas_call(
        kernel,
        out_shape=(jax.ShapeDtypeStruct((B, S, hdv), jnp.float32),
                   jax.ShapeDtypeStruct((B, n_head, S, S), jnp.float32)),
        grid=(B,),
        in_specs=in_specs,
        out_specs=(pl.BlockSpec((None, S, hdv), lambda b: (b, 0, 0)),
                   pl.BlockSpec((None, n_head, S, S), lambda b: (b, 0, 0, 0))),
        compiler_params=_compiler_params(("parallel",)),
    )(*args)
    return ctx, attn


def pallas_proj_add_ln(ctx, res, w_o, b_o, gamma, beta, eps=LN_EPS):
    M, Din = ctx.shape
    D = w_o.shape[1]
    wb = int(w_o.size) * w_o.dtype.itemsize + 4 * int(b_o.size + gamma.size + beta.size)
    tm = _choose_m_tile(M, 4 * (Din + 2 * D), wb)
    return pl.pallas_call(
        functools.partial(_proj_add_ln_kernel, eps=eps),
        out_shape=jax.ShapeDtypeStruct((M, D), jnp.float32),
        grid=(pl.cdiv(M, tm),),
        in_specs=[pl.BlockSpec((tm, Din), lambda i: (i, 0)),
                  pl.BlockSpec((tm, D), lambda i: (i, 0)),
                  pl.BlockSpec((Din, D), lambda i: (0, 0)),
                  pl.BlockSpec((1, D), lambda i: (0, 0)),
                  pl.BlockSpec((1, D), lambda i: (0, 0)),
                  pl.BlockSpec((1, D), lambda i: (0, 0))],
        out_specs=pl.BlockSpec((tm, D), lambda i: (i, 0)),
        compiler_params=_compiler_params(("parallel",)),
    )(ctx, res, w_o, b_o.reshape(1, D), gamma.reshape(1, D), beta.reshape(1, D))


def pallas_ffn_add_ln(x, w1, b1, w2, b2, gamma, beta, eps=LN_EPS):
    M, D = x.shape
    Dff = w1.shape[1]
    wb = (int(w1.size) * w1.dtype.itemsize + int(w2.size) * w2.dtype.itemsize
          + 4 * int(b1.size + b2.size + gamma.size + beta.size))
    tm = _choose_m_tile(M, 4 * (2 * D + Dff), wb)
    return pl.pallas_call(
        functools.partial(_ffn_add_ln_kernel, eps=eps),
        out_shape=jax.ShapeDtypeStruct((M, D), jnp.float32),
        grid=(pl.cdiv(M, tm),),
        in_specs=[pl.BlockSpec((tm, D), lambda i: (i, 0)),
                  pl.BlockSpec((D, Dff), lambda i: (0, 0)),
                  pl.BlockSpec((1, Dff), lambda i: (0, 0)),
                  pl.BlockSpec((Dff, D), lambda i: (0, 0)),
                  pl.BlockSpec((1, D), lambda i: (0, 0)),
                  pl.BlockSpec((1, D), lambda i: (0, 0)),
                  pl.BlockSpec((1, D), lambda i: (0, 0))],
        out_specs=pl.BlockSpec((tm, D), lambda i: (i, 0)),
        compiler_params=_compiler_params(("parallel",)),
    )(x, w1, b1.reshape(1, Dff), w2, b2.reshape(1, D),
      gamma.reshape(1, D), beta.reshape(1, D))


# ----------------------------------------------------------------------------
# Parameter init + forward (glue in plain JAX)
# ----------------------------------------------------------------------------

def sinusoid_table(n_position, d_embed):
    pos = jnp.arange(n_position, dtype=jnp.float32)[:, None]
    i = jnp.arange(d_embed, dtype=jnp.float32)[None, :]
    angle = pos / jnp.power(10000.0, (2.0 * jnp.floor(i / 2.0)) / d_embed)
    pe = jnp.where(jnp.arange(d_embed)[None, :] % 2 == 0,
                   jnp.sin(angle), jnp.cos(angle))
    return pe.astype(jnp.float32)          # (n_position, d_embed)


def init_encoder_params(key, num_layers, d_embed, n_head, d_k, d_v, d_ff,
                        n_position=200):
    wdt = MATMUL_DTYPE if MATMUL_DTYPE is not None else jnp.float32
    layers = []
    for _ in range(num_layers):
        keys = jax.random.split(key, 7)
        key = keys[0]
        s = 0.02
        w_q = s * jax.random.normal(keys[1], (d_embed, n_head * d_k), jnp.float32)
        w_k = s * jax.random.normal(keys[2], (d_embed, n_head * d_k), jnp.float32)
        w_v = s * jax.random.normal(keys[3], (d_embed, n_head * d_v), jnp.float32)
        lp = {
            "w_qkv": jnp.concatenate([w_q, w_k, w_v], axis=1).astype(wdt),
            "b_qkv": jnp.zeros((n_head * (2 * d_k + d_v),), jnp.float32),
            "w_o": (s * jax.random.normal(keys[4], (n_head * d_v, d_embed),
                                          jnp.float32)).astype(wdt),
            "b_o": jnp.zeros((d_embed,), jnp.float32),
            "ln1_g": jnp.ones((d_embed,), jnp.float32),
            "ln1_b": jnp.zeros((d_embed,), jnp.float32),
            "w1": (s * jax.random.normal(keys[5], (d_embed, d_ff),
                                         jnp.float32)).astype(wdt),
            "b1": jnp.zeros((d_ff,), jnp.float32),
            "w2": (s * jax.random.normal(keys[6], (d_ff, d_embed),
                                         jnp.float32)).astype(wdt),
            "b2": jnp.zeros((d_embed,), jnp.float32),
            "ln2_g": jnp.ones((d_embed,), jnp.float32),
            "ln2_b": jnp.zeros((d_embed,), jnp.float32),
        }
        layers.append(lp)
    return {
        "layers": layers,
        "pe": sinusoid_table(n_position, d_embed),
        "n_head": n_head,
        "d_k": d_k,
        "d_v": d_v,
    }


def _normalize_mask(mask, B, S):
    """Accepts (S,S), (1,S,S), (B,S,S) or (B|1,1,S,S); nonzero = attend."""
    if mask is None:
        return None
    m = jnp.asarray(mask)
    if m.ndim == 4:
        m = m[:, 0]
    if m.ndim == 2:
        m = m[None]
    m = jnp.broadcast_to(m, (B, S, S))
    return (m != 0).astype(jnp.int8)


def encoder_layer_forward(lp, x, mask_i8, n_head, d_k, d_v):
    B, S, D = x.shape
    M = B * S
    hdk = n_head * d_k
    hdv = n_head * d_v
    x2 = x.reshape(M, D)

    # --- multi-head self-attention (post-norm) ---
    q, k, v = pallas_qkv(x2, lp["w_qkv"], lp["b_qkv"], hdk, hdk, hdv)
    ctx, attn = pallas_attention(q.reshape(B, S, hdk), k.reshape(B, S, hdk),
                                 v.reshape(B, S, hdv), mask_i8,
                                 n_head, d_k, d_v)
    x2 = pallas_proj_add_ln(ctx.reshape(M, hdv), x2, lp["w_o"], lp["b_o"],
                            lp["ln1_g"], lp["ln1_b"])

    # --- position-wise FFN (post-norm), residual+LN fused in-kernel ---
    x2 = pallas_ffn_add_ln(x2, lp["w1"], lp["b1"], lp["w2"], lp["b2"],
                           lp["ln2_g"], lp["ln2_b"])
    return x2.reshape(B, S, D), attn


def encoder_forward(params, src, mask=None):
    """src: (B, S, D) float32; mask: optional, nonzero = attend."""
    B, S, D = src.shape
    pe = params["pe"][:S]
    x = pallas_add_pe(src.astype(jnp.float32), pe)
    mask_i8 = _normalize_mask(mask, B, S)

    attentions = []
    for lp in params["layers"]:
        x, attn = encoder_layer_forward(lp, x, mask_i8, params["n_head"],
                                        params["d_k"], params["d_v"])
        attentions.append(attn)
    # self.norm is None in the reference default -> no final norm
    return x, attentions


# ----------------------------------------------------------------------------
# Demo
# ----------------------------------------------------------------------------

if __name__ == "__main__":
    B, S, D = 2, 8, 32
    n_head, d_k, d_v, d_ff = 4, 8, 8, 64
    num_layers = 2

    key = jax.random.PRNGKey(0)
    k_src, k_par = jax.random.split(key)
    src = jax.random.normal(k_src, (B, S, D), jnp.float32)

    params = init_encoder_params(k_par, num_layers, D, n_head, d_k, d_v, d_ff,
                                 n_position=200)

    out, attentions = encoder_forward(params, src, mask=None)
    out = jax.block_until_ready(out)
    attentions = [jax.block_until_ready(a) for a in attentions]

    assert out.shape == (B, S, D)
    assert len(attentions) == num_layers
    assert all(a.shape == (B, n_head, S, S) for a in attentions)
    assert bool(jnp.all(jnp.isfinite(out)))
    assert all(bool(jnp.all(jnp.isfinite(a))) for a in attentions)
    print("KERNEL_OK")
</pallas_src>

<mosaic_0001>
module attributes {stable_mosaic.version = 11 : i64} {
  func.func @_add_pe_kernel(%arg0: i32, %arg1: i32, %arg2: memref<1x8x32xf32, #tpu.memory_space<vmem>>, %arg3: memref<8x32xf32, #tpu.memory_space<vmem>>, %arg4: memref<1x8x32xf32, #tpu.memory_space<vmem>>) attributes {dimension_semantics = [#tpu.dimension_semantics<parallel>, #tpu.dimension_semantics<parallel>], iteration_bounds = array<i64: 2, 1>, scalar_prefetch = 0 : i64, scratch_operands = 0 : i64, tpu.core_type = #tpu.core_type<tc>, window_params = [{transform_indices = @transform_0, window_bounds = array<i64: 1, 8, 32>}, {transform_indices = @transform_1, window_bounds = array<i64: 8, 32>}, {transform_indices = @transform_2, window_bounds = array<i64: 1, 8, 32>}]} {
    %c0 = arith.constant 0 : index
    %c0_0 = arith.constant 0 : index
    %c0_1 = arith.constant 0 : index
    %0 = vector.load %arg2[%c0, %c0_0, %c0_1] : memref<1x8x32xf32, #tpu.memory_space<vmem>>, vector<1x8x32xf32>
    %1 = vector.shape_cast %0 : vector<1x8x32xf32> to vector<8x32xf32>
    %c0_2 = arith.constant 0 : index
    %c0_3 = arith.constant 0 : index
    %2 = vector.load %arg3[%c0_2, %c0_3] : memref<8x32xf32, #tpu.memory_space<vmem>>, vector<8x32xf32>
    %3 = arith.addf %1, %2 : vector<8x32xf32>
    %c0_4 = arith.constant 0 : index
    %c0_5 = arith.constant 0 : index
    %c0_6 = arith.constant 0 : index
    %4 = vector.load %arg4[%c0_4, %c0_5, %c0_6] : memref<1x8x32xf32, #tpu.memory_space<vmem>>, vector<1x8x32xf32>
    %5 = vector.shape_cast %4 : vector<1x8x32xf32> to vector<8x32xf32>
    %6 = vector.shape_cast %3 : vector<8x32xf32> to vector<1x8x32xf32>
    tpu.vector_store %arg4[%c0_4, %c0_5, %c0_6], %6 {strides = array<i32>} : memref<1x8x32xf32, #tpu.memory_space<vmem>>, vector<1x8x32xf32>,
    return
  }
  func.func @transform_0(%arg0: i32, %arg1: i32) -> (i32, i32, i32) {
    %c0_i32 = arith.constant 0 : i32
    %c0_i32_0 = arith.constant 0 : i32
    return %arg0, %arg1, %c0_i32 : i32, i32, i32
  }
  func.func @transform_1(%arg0: i32, %arg1: i32) -> (i32, i32) {
    %c0_i32 = arith.constant 0 : i32
    %c0_i32_0 = arith.constant 0 : i32
    return %arg1, %c0_i32 : i32, i32
  }
  func.func @transform_2(%arg0: i32, %arg1: i32) -> (i32, i32, i32) {
    %c0_i32 = arith.constant 0 : i32
    %c0_i32_0 = arith.constant 0 : i32
    return %arg0, %arg1, %c0_i32 : i32, i32, i32
  }
}

</mosaic_0001>

<llo_original>
// kernel: tpu_custom_call.1
$region0: #{tpu_custom_call.1}
  #allocation0 [shape = 'u32[]', space=smem, size = 0x4, offset = 0x4, fixed_abs, tag = 'smem constant byte address 0x4 - core index']
  #allocation1 [shape = 'u32[144,128]{1,0:T(1,128)}', space=vmem, size = 0x12000, scoped, tag = 'internal scratch']
  %s0 = inlined_call_operand.hbm [shape: f32[2,8,32], index: 0, kind: input, shape index: {}]
  %s1 = inlined_call_operand.hbm [shape: f32[8,32], index: 1, kind: input, shape index: {}]
  %s2 = inlined_call_operand.hbm [shape: f32[2,8,32], index: 2, kind: output, shape index: {}]
  %s3 = sld [smem:[#allocation0]]
  $region49: #{tpu_custom_call.1} parent=0
    _
  %s5 = ssub.s32 1, %s3
  %s6 = scalar_select 0, %s5, %s3
  $region1: #{tpu_custom_call.1} parent=0
    #allocation2 [shape = 'u8[8192]{0}', space=vmem, size = 0x2000, scoped, tag = 'input window, operand 0']
    #allocation3 [shape = 's32[2]{0}', space=sflag, size = 0x8, scoped, tag = 'scoped memory for tpu_custom_call.1']
    #allocation4 [shape = 's32[2]{0}', space=sflag, size = 0x8, scoped, tag = 'scoped memory for tpu_custom_call.1']
    #allocation5 [shape = 'u8[4096]{0}', space=vmem, size = 0x1000, scoped, tag = 'input window, operand 1, single buffered']
    #allocation6 [shape = 's32[1]{0}', space=sflag, size = 0x4, scoped, tag = 'scoped memory for tpu_custom_call.1']
    #allocation7 [shape = 'u8[8192]{0}', space=vmem, size = 0x2000, scoped, tag = 'output window, operand 0']
    %7 = vsyncpa [#allocation3], 0
    %s8 = scalar_lea.sflag [#allocation3], 1
    %9 = vsyncpa %s8, 0
    %10 = vsyncpa [#allocation6], 0
    %11 = vsyncpa [#allocation4], 0
    %s12 = scalar_lea.sflag [#allocation4], 1
    %13 = vsyncpa %s12, 0
    loop: start=0, step=1, limit=4
    $region2: #{tpu_custom_call.1} parent=1 // loop_pre_header
      _
    $region3: #{tpu_custom_call.1} parent=1 // loop_header
      %s15 = sphi 0, %s19
      %p16 = scmp.ge.s32.totalorder %s15, 4
      %s22 = sphi 0, %s34
      %s23 = sphi 0, %s30
      %s24 = sphi 0, %s22
      %s25 = sphi 0, %s23
      %s26 = sphi 0, %s24
      %s27 = sphi 0, %s25
      %s39 = sphi 0, %s41
      %s42 = sphi 0, %s39
      %s43 = sphi 0, %s42
      %s59 = sphi 0, %s43
      %s65 = sphi 0, %s67
      %s68 = sphi 0, %s65
      %s69 = sphi 0, %s68
      %s85 = sphi 0, %s69
      %s93 = sphi 0, %s95
      %s96 = sphi 0, %s93
      %s97 = sphi 0, %s96
      %s113 = sphi 0, %s97
    $region4: #{tpu_custom_call.1} parent=1 // loop_header_branch
      %18 = sbr.rel (%p16) target = $region8
    $region5: #{tpu_custom_call.1} parent=1 // loop_body
      %s20 = ssub.s32 %s15, 1
      %s21 = ssub.s32 %s15, 2
      %s28 = sadd.s32 1, %s23
      %p29 = scmp.ge.s32.totalorder %s28, 1
      %s30 = scalar_select %p29, 0, %s28
      %s31 = sadd.s32 1, %s22
      %s32 = scalar_select %p29, %s31, %s22
      %p33 = scmp.ge.s32.totalorder %s32, 2
      %s34 = scalar_select %p33, 0, %s32
      %s35 = ssub.s32 %s22, %s34
      %s36 = ssub.s32 %s23, %s30
      %s37 = sor.u32 %s35, %s36
      %p38 = scmp.eq.s32.totalorder %s37, 0
      %s40 = sadd.s32 %s39, 1
      %s41 = scalar_select %p38, %s39, %s40
      %p44 = pneg %p38
      %p45 = scmp.eq.s32.totalorder %s15, 1
      %p46 = por %p44, %p45
      %p47 = scmp.ne.s32.totalorder %s39, %s42
      %p48 = scmp.eq.s32.totalorder %s15, 0
      %p49 = por %p47, %p48
      %p50 = scmp.ne.s32.totalorder %s39, %s42
      %p51 = scmp.eq.s32.totalorder %s20, 1
      %p52 = por %p50, %p51
      %p53 = scmp.ne.s32.totalorder %s42, %s43
      %p54 = scmp.eq.s32.totalorder %s20, 0
      %p55 = por %p53, %p54
      %p56 = scmp.ne.s32.totalorder %s42, %s43
      %p57 = scmp.eq.s32.totalorder %s21, 1
      %p58 = por %p56, %p57
      %p60 = scmp.ne.s32.totalorder %s43, %s59
      %p61 = scmp.eq.s32.totalorder %s21, 0
      %p62 = por %p60, %p61
      %s63 = ssub.s32 %s23, %s30
      %p64 = scmp.eq.s32.totalorder %s63, 0
      %s66 = sadd.s32 %s65, 1
      %s67 = scalar_select %p64, %s65, %s66
      %p70 = pneg %p64
      %p71 = scmp.eq.s32.totalorder %s15, 1
      %p72 = por %p70, %p71
      %p73 = scmp.ne.s32.totalorder %s65, %s68
      %p74 = scmp.eq.s32.totalorder %s15, 0
      %p75 = por %p73, %p74
      %p76 = scmp.ne.s32.totalorder %s65, %s68
      %p77 = scmp.eq.s32.totalorder %s20, 1
      %p78 = por %p76, %p77
      %p79 = scmp.ne.s32.totalorder %s68, %s69
      %p80 = scmp.eq.s32.totalorder %s20, 0
      %p81 = por %p79, %p80
      %p82 = scmp.ne.s32.totalorder %s68, %s69
      %p83 = scmp.eq.s32.totalorder %s21, 1
      %p84 = por %p82, %p83
      %p86 = scmp.ne.s32.totalorder %s69, %s85
      %p87 = scmp.eq.s32.totalorder %s21, 0
      %p88 = por %p86, %p87
      %s89 = ssub.s32 %s22, %s34
      %s90 = ssub.s32 %s23, %s30
      %s91 = sor.u32 %s89, %s90
      %p92 = scmp.eq.s32.totalorder %s91, 0
      %s94 = sadd.s32 %s93, 1
      %s95 = scalar_select %p92, %s93, %s94
      %p98 = pneg %p92
      %p99 = scmp.eq.s32.totalorder %s15, 1
      %p100 = por %p98, %p99
      %p101 = scmp.ne.s32.totalorder %s93, %s96
      %p102 = scmp.eq.s32.totalorder %s15, 0
      %p103 = por %p101, %p102
      %p104 = scmp.ne.s32.totalorder %s93, %s96
      %p105 = scmp.eq.s32.totalorder %s20, 1
      %p106 = por %p104, %p105
      %p107 = scmp.ne.s32.totalorder %s96, %s97
      %p108 = scmp.eq.s32.totalorder %s20, 0
      %p109 = por %p107, %p108
      %p110 = scmp.ne.s32.totalorder %s96, %s97
      %p111 = scmp.eq.s32.totalorder %s21, 1
      %p112 = por %p110, %p111
      %p114 = scmp.ne.s32.totalorder %s97, %s113
      %p115 = scmp.eq.s32.totalorder %s21, 0
      %p116 = por %p114, %p115
      %p117 = scmp.le.s32.totalorder 1, %s15
      %p118 = scmp.lt.s32.totalorder %s15, 3
      %p119 = pnand %p117, %p118
      %p120 = pneg %p119
      // Predicated region
      $region9: #{tpu_custom_call.1} parent=5 // pred_check
        _
      $region10: #{tpu_custom_call.1} parent=5 // pred_check_branch
        %122 = sbr.rel (%p119) target = $region12
      $region11: #{tpu_custom_call.1} parent=5 // pred_region
        %s123 = ssub.s32 %s15, 1
        // Predicated region
        $region13: #{tpu_custom_call.1} parent=11 // pred_check
          %p124 = pneg %p81
        $region14: #{tpu_custom_call.1} parent=11 // pred_check_branch
          %126 = sbr.rel (%p124) target = $region16
        $region15: #{tpu_custom_call.1} parent=11 // pred_region
          %s128 = ssub.s32 128, 128
          %129 = vsyncadd [#allocation6], %s128
          %s130 = smul.addr %s25, 128
          %s131 = scalar_lea.hbm %s1, %s130
          %s133 = sshll.u32 [#allocation5], 4
          %s134 = int_to_ptr.vmem [resolvable:$true] %s133
          %136 = dma.hbm_to_vmem [thread:$0]  %s131, 128, %s134, [#allocation6]
        $region16: #{tpu_custom_call.1} parent=11 // pred_fallthru
          _
      $region12: #{tpu_custom_call.1} parent=5 // pred_fallthru
        _
      %p137 = scmp.lt.s32.totalorder %s15, 2
      // Predicated region
      $region17: #{tpu_custom_call.1} parent=5 // pred_check
        %p138 = pneg %p137
      $region18: #{tpu_custom_call.1} parent=5 // pred_check_branch
        %140 = sbr.rel (%p138) target = $region20
      $region19: #{tpu_custom_call.1} parent=5 // pred_region
        // Predicated region
        $region21: #{tpu_custom_call.1} parent=19 // pred_check
          %p141 = pneg %p49
        $region22: #{tpu_custom_call.1} parent=19 // pred_check_branch
          %143 = sbr.rel (%p141) target = $region24
        $region23: #{tpu_custom_call.1} parent=19 // pred_region
          %s144 = sand.u32 %s39, 1
          %s145 = scalar_lea.sflag [#allocation3], %s144
          %s146 = sand.u32 %s39, 1
          %s147 = smul.addr %s146, 8
          %s148 = scalar_lea.vmem [#allocation2], %s147
          %s150 = ssub.s32 128, 128
          %151 = vsyncadd %s145, %s150
          %s152 = sadd.s32 %s23, %s22
          %s153 = smul.addr %s152, 128
          %s154 = scalar_lea.hbm %s0, %s153
          %s156 = sshll.u32 %s148, 4
          %s157 = int_to_ptr.vmem [resolvable:$true] %s156
          %159 = dma.hbm_to_vmem [thread:$0]  %s154, 128, %s157, %s145
        $region24: #{tpu_custom_call.1} parent=19 // pred_fallthru
          _
      $region20: #{tpu_custom_call.1} parent=5 // pred_fallthru
        _
      %p160 = scmp.le.s32.totalorder 1, %s15
      %p161 = scmp.lt.s32.totalorder %s15, 3
      %p162 = pnand %p160, %p161
      %p163 = pneg %p162
      // Predicated region
      $region25: #{tpu_custom_call.1} parent=5 // pred_check
        _
      $region26: #{tpu_custom_call.1} parent=5 // pred_check_branch
        %165 = sbr.rel (%p162) target = $region28
      $region27: #{tpu_custom_call.1} parent=5 // pred_region
        %s166 = ssub.s32 %s15, 1
        %s167 = sand.u32 %s42, 1
        %s168 = scalar_lea.sflag [#allocation3], %s167
        %s169 = sand.u32 %s42, 1
        %s170 = smul.addr %s169, 8
        %s171 = scalar_lea.vmem [#allocation2], %s170
        // Predicated region
        $region29: #{tpu_custom_call.1} parent=27 // pred_check
          %p172 = pneg %p55
        $region30: #{tpu_custom_call.1} parent=27 // pred_check_branch
          %174 = sbr.rel (%p172) target = $region32
        $region31: #{tpu_custom_call.1} parent=27 // pred_region
          %175 = dma.done %s168, 128
        $region32: #{tpu_custom_call.1} parent=27 // pred_fallthru
          _
        // Predicated region
        $region33: #{tpu_custom_call.1} parent=27 // pred_check
          %p176 = pneg %p81
        $region34: #{tpu_custom_call.1} parent=27 // pred_check_branch
          %178 = sbr.rel (%p176) target = $region36
        $region35: #{tpu_custom_call.1} parent=27 // pred_region
          %179 = dma.done [#allocation6], 128
        $region36: #{tpu_custom_call.1} parent=27 // pred_fallthru
          _
        %s180 = sand.u32 %s42, 1
        %s181 = scalar_lea.sflag [#allocation3], %s180
        %s182 = sand.u32 %s42, 1
        %s183 = smul.addr %s182, 8
        %s184 = scalar_lea.vmem [#allocation2], %s183
        %p185 = pneg %p55
        %p186 = pneg %p52
        %p187 = pneg %p81
        %p188 = pneg %p78
        %p189 = pneg %p109
        %p190 = pneg %p106
        %s191 = sand.u32 %s96, 1
        %s192 = scalar_lea.sflag [#allocation4], %s191
        %s193 = sand.u32 %s96, 1
        %s194 = smul.addr %s193, 8
        %s195 = scalar_lea.vmem [#allocation7], %s194
        %v196 = vld [vmem:[%s171] sm:$0xff]
        %v197 = vld [vmem:[#allocation5] sm:$0xff]
        %v198 = vadd.f32 %v196, %v197
        %vm199 = vcmask 261120
        %200 = vst.msk [vmem:[%s195] sm:$0xff] %vm199, %v198
        %s201 = sand.u32 %s96, 1
        %s202 = scalar_lea.sflag [#allocation4], %s201
        %s203 = sand.u32 %s96, 1
        %s204 = smul.addr %s203, 8
        %s205 = scalar_lea.vmem [#allocation7], %s204
        // Predicated region
        $region37: #{tpu_custom_call.1} parent=27 // pred_check
          %p206 = pneg %p106
        $region38: #{tpu_custom_call.1} parent=27 // pred_check_branch
          %208 = sbr.rel (%p206) target = $region40
        $region39: #{tpu_custom_call.1} parent=27 // pred_region
          %s210 = ssub.s32 128, 128
          %211 = vsyncadd %s202, %s210
          %s212 = sadd.s32 %s25, %s24
          %s213 = smul.addr %s212, 128
          %s214 = scalar_lea.hbm %s2, %s213
          %s216 = sshll.u32 %s205, 4
          %s217 = int_to_ptr.vmem [resolvable:$true] %s216
          %219 = dma.vmem_to_hbm [thread:$0]  %s217, 128, %s214, %s202
        $region40: #{tpu_custom_call.1} parent=27 // pred_fallthru
          _
      $region28: #{tpu_custom_call.1} parent=5 // pred_fallthru
        _
      %p220 = scmp.le.s32.totalorder 2, %s15
      // Predicated region
      $region41: #{tpu_custom_call.1} parent=5 // pred_check
        %p221 = pneg %p220
      $region42: #{tpu_custom_call.1} parent=5 // pred_check_branch
        %223 = sbr.rel (%p221) target = $region44
      $region43: #{tpu_custom_call.1} parent=5 // pred_region
        %s224 = ssub.s32 %s15, 2
        // Predicated region
        $region45: #{tpu_custom_call.1} parent=43 // pred_check
          %p225 = pneg %p112
        $region46: #{tpu_custom_call.1} parent=43 // pred_check_branch
          %227 = sbr.rel (%p225) target = $region48
        $region47: #{tpu_custom_call.1} parent=43 // pred_region
          %s228 = sand.u32 %s97, 1
          %s229 = scalar_lea.sflag [#allocation4], %s228
          %s230 = sand.u32 %s97, 1
          %s231 = smul.addr %s230, 8
          %s232 = scalar_lea.vmem [#allocation7], %s231
          %233 = dma.done %s229, 128
        $region48: #{tpu_custom_call.1} parent=43 // pred_fallthru
          _
      $region44: #{tpu_custom_call.1} parent=5 // pred_fallthru
        _
    $region6: #{tpu_custom_call.1} parent=1 // loop_footer
      %s19 = sadd.s32 1, %s15
    $region7: #{tpu_custom_call.1} parent=1 // loop_footer_branch
      %14 = sbr.rel target = $region3
    $region8: #{tpu_custom_call.1} parent=1 // loop_exit
      _
    %234 = vsyncpa [#allocation3], 1
    %s235 = scalar_lea.sflag [#allocation3], 1
    %236 = vsyncpa %s235, 1
    %237 = vsyncpa [#allocation6], 1
    %238 = vsyncpa [#allocation4], 1
    %s239 = scalar_lea.sflag [#allocation4], 1
    %240 = vsyncpa %s239, 1

</llo_original>
